<compile_context>
chip_gen: v5e
topology: v5e:2x2
jax: 0.10.0
libtpu: 0.0.40
codegen_flags: <defaults>
</compile_context>

<pallas_src>
import jax
import jax.numpy as jnp
import numpy as np
from jax import lax
from jax.experimental import pallas as pl
from jax.experimental.pallas import tpu as pltpu


def _round_up(x, m):
    return (x + m - 1) // m * m


def _stats_kernel(p_ref, w_ref, sum_ref, sq_ref):
    """Pass 1: per-channel sum / sum-of-squares of the conv output."""
    @pl.when(pl.program_id(0) == 0)
    def _init():
        sum_ref[...] = jnp.zeros_like(sum_ref)
        sq_ref[...] = jnp.zeros_like(sq_ref)

    acc = jnp.dot(p_ref[...], w_ref[...], preferred_element_type=jnp.float32)
    sum_ref[...] += jnp.sum(acc, axis=0, keepdims=True)
    sq_ref[...] += jnp.sum(acc * acc, axis=0, keepdims=True)


def _norm_kernel(p_ref, w_ref, s_ref, b_ref, o_ref):
    """Pass 2: GEMM + folded BN affine + ReLU (lane-dense output)."""
    acc = jnp.dot(p_ref[...], w_ref[...], preferred_element_type=jnp.float32)
    o_ref[...] = jnp.maximum(acc * s_ref[...] + b_ref[...], 0.0).astype(o_ref.dtype)


def conv_bn_relu(x_nchw, weight_oihw, gamma, beta, *, strides=(1, 1), eps=1e-5,
                 compute_dtype=jnp.bfloat16, tile_m=4096):
    """Forward of ConvBnRelu. x_nchw: (N, Cin, H, W); weight: (Cout, Cin, KH, KW)."""
    N, Cin, H, W = x_nchw.shape
    Cout, _, KH, KW = weight_oihw.shape
    sh, sw = strides
    ph, pw = KH // 2, KW // 2  # 'same' padding
    Ho = (H + 2 * ph - KH) // sh + 1
    Wo = (W + 2 * pw - KW) // sw + 1

    M = N * Ho * Wo
    K = KH * KW * Cin
    Cout_pad = _round_up(Cout, 128)           # lane-dense output / full MXU N-dim

    # ---- M-tile sized from a VMEM budget (safe on v7x's 64 MiB VMEM) ----
    in_item = jnp.dtype(compute_dtype).itemsize
    out_item = jnp.dtype(x_nchw.dtype).itemsize
    # double-buffered patch + output tiles, plus an f32 GEMM accumulator
    per_row = 2 * K * in_item + 2 * Cout_pad * out_item + Cout_pad * 4
    fixed = 2 * K * Cout_pad * in_item + 8 * Cout_pad * 4   # weights + scale/bias
    budget = 28 * 1024 * 1024
    tm_fit = max(256, (budget - fixed) // per_row // 128 * 128)
    tm = min(tile_m, tm_fit, _round_up(M, 128))
    M_pad = _round_up(M, tm)
    n_tiles = M_pad // tm

    # ---- glue: im2col patch extraction (data rearrangement done by XLA) ----
    x_nhwc = jnp.transpose(x_nchw, (0, 2, 3, 1))
    xp = jnp.pad(x_nhwc, ((0, 0), (ph, ph), (pw, pw), (0, 0)))
    taps = [
        xp[:, kh: kh + sh * Ho: sh, kw: kw + sw * Wo: sw, :]
        for kh in range(KH)
        for kw in range(KW)
    ]
    patches = jnp.concatenate(taps, axis=-1).reshape(M, K)
    # Zero-pad M rows (exactly zero contribution to stats) and cast for the MXU.
    patches = jnp.pad(patches, ((0, M_pad - M), (0, 0))).astype(compute_dtype)

    wmat = jnp.transpose(weight_oihw, (2, 3, 1, 0)).reshape(K, Cout)
    wmat = jnp.pad(wmat, ((0, 0), (0, Cout_pad - Cout))).astype(compute_dtype)

    gemm_flops = 2 * M_pad * K * Cout_pad
    p_bytes = M_pad * K * in_item
    w_bytes = K * Cout_pad * in_item
    out_bytes = M_pad * Cout_pad * out_item

    # ---- pass 1: BN statistics (global sum / sum-of-squares per channel) ----
    sum_c, sq_c = pl.pallas_call(
        _stats_kernel,
        out_shape=(jax.ShapeDtypeStruct((1, Cout_pad), jnp.float32),
                   jax.ShapeDtypeStruct((1, Cout_pad), jnp.float32)),
        grid=(n_tiles,),
        in_specs=[
            pl.BlockSpec((tm, K), lambda i: (i, 0)),
            pl.BlockSpec((K, Cout_pad), lambda i: (0, 0)),
        ],
        out_specs=(pl.BlockSpec((1, Cout_pad), lambda i: (0, 0)),
                   pl.BlockSpec((1, Cout_pad), lambda i: (0, 0))),
        compiler_params=pltpu.CompilerParams(
            dimension_semantics=("arbitrary",)),
        cost_estimate=pl.CostEstimate(
            flops=gemm_flops + 3 * M_pad * Cout_pad,
            transcendentals=0,
            bytes_accessed=p_bytes + w_bytes + 2 * Cout_pad * 4),
    )(patches, wmat)

    # ---- finalize: biased variance + folded affine (tiny per-channel math) ----
    inv_m = 1.0 / float(M)                    # divisor is the TRUE row count
    mean = sum_c * inv_m
    var = jnp.maximum(sq_c * inv_m - mean * mean, 0.0)   # biased var (PyTorch BN)
    gamma_p = jnp.pad(gamma.astype(jnp.float32).reshape(1, Cout),
                      ((0, 0), (0, Cout_pad - Cout)))
    beta_p = jnp.pad(beta.astype(jnp.float32).reshape(1, Cout),
                     ((0, 0), (0, Cout_pad - Cout)))
    scale = gamma_p * lax.rsqrt(var + eps)
    bias = beta_p - mean * scale

    # ---- pass 2: GEMM + normalize + ReLU, tiled + pipelined + megacore ----
    out_flat = pl.pallas_call(
        _norm_kernel,
        out_shape=jax.ShapeDtypeStruct((M_pad, Cout_pad), x_nchw.dtype),
        grid=(n_tiles,),
        in_specs=[
            pl.BlockSpec((tm, K), lambda i: (i, 0)),
            pl.BlockSpec((K, Cout_pad), lambda i: (0, 0)),
            pl.BlockSpec((1, Cout_pad), lambda i: (0, 0)),
            pl.BlockSpec((1, Cout_pad), lambda i: (0, 0)),
        ],
        out_specs=pl.BlockSpec((tm, Cout_pad), lambda i: (i, 0)),
        compiler_params=pltpu.CompilerParams(
            dimension_semantics=("parallel",)),
        cost_estimate=pl.CostEstimate(
            flops=gemm_flops + 2 * M_pad * Cout_pad,
            transcendentals=0,
            bytes_accessed=p_bytes + w_bytes + out_bytes),
    )(patches, wmat, scale, bias)

    out_nhwc = out_flat[:M, :Cout].reshape(N, Ho, Wo, Cout)
    return jnp.transpose(out_nhwc, (0, 3, 1, 2))  # back to NCHW


def _reference(x, w, gamma, beta, eps=1e-5):
    """Pure-JAX reference (conv -> training-mode BN -> ReLU), NCHW, f32."""
    y = lax.conv_general_dilated(
        x, w, window_strides=(1, 1), padding="SAME",
        dimension_numbers=("NCHW", "OIHW", "NCHW"),
    )
    mean = y.mean(axis=(0, 2, 3), keepdims=True)
    var = ((y - mean) ** 2).mean(axis=(0, 2, 3), keepdims=True)  # biased
    yhat = (y - mean) / jnp.sqrt(var + eps)
    yhat = yhat * gamma.reshape(1, -1, 1, 1) + beta.reshape(1, -1, 1, 1)
    return jnp.maximum(yhat, 0.0)


if __name__ == "__main__":
    # ConvBnRelu(in_ch=4, filters=8, ksize=(3,3), strides=(1,1), padding='same')
    N, Cin, H, W = 2, 4, 16, 16
    Cout, KH, KW = 8, 3, 3

    key = jax.random.PRNGKey(0)
    kx, kw, kg, kb = jax.random.split(key, 4)
    x = jax.random.normal(kx, (N, Cin, H, W), dtype=jnp.float32)
    weight = jax.random.normal(kw, (Cout, Cin, KH, KW), dtype=jnp.float32) * 0.1
    gamma = 1.0 + 0.1 * jax.random.normal(kg, (Cout,), dtype=jnp.float32)
    beta = 0.1 * jax.random.normal(kb, (Cout,), dtype=jnp.float32)

    ref = jax.block_until_ready(_reference(x, weight, gamma, beta))

    # Exact-ish f32 path (strict semantic check).
    out_f32 = jax.block_until_ready(
        conv_bn_relu(x, weight, gamma, beta, compute_dtype=jnp.float32))
    np.testing.assert_allclose(np.asarray(out_f32), np.asarray(ref),
                               atol=1e-3, rtol=1e-3)

    # Fast bf16-MXU path (default): looser tolerance for bf16 operands.
    out_bf16 = jax.block_until_ready(conv_bn_relu(x, weight, gamma, beta))
    np.testing.assert_allclose(np.asarray(out_bf16), np.asarray(ref),
                               atol=5e-2, rtol=5e-2)

    print("KERNEL_OK")
</pallas_src>

<mosaic_0001>
module attributes {stable_mosaic.version = 11 : i64} {
  func.func @_stats_kernel(%arg0: i32, %arg1: memref<512x36xf32, #tpu.memory_space<vmem>>, %arg2: memref<36x128xf32, #tpu.memory_space<vmem>>, %arg3: memref<1x128xf32, #tpu.memory_space<vmem>>, %arg4: memref<1x128xf32, #tpu.memory_space<vmem>>) attributes {dimension_semantics = [#tpu.dimension_semantics<arbitrary>], iteration_bounds = array<i64: 1>, scalar_prefetch = 0 : i64, scratch_operands = 0 : i64, tpu.core_type = #tpu.core_type<tc>, window_params = [{transform_indices = @transform_0, window_bounds = array<i64: 512, 36>}, {pipeline_mode = #tpu.pipeline_mode<synchronous>, transform_indices = @transform_1, window_bounds = array<i64: 36, 128>}, {pipeline_mode = #tpu.pipeline_mode<synchronous>, transform_indices = @transform_2, window_bounds = array<i64: 1, 128>}, {pipeline_mode = #tpu.pipeline_mode<synchronous>, transform_indices = @transform_3, window_bounds = array<i64: 1, 128>}]} {
    %c0_i32 = arith.constant 0 : i32
    %0 = arith.cmpi eq, %arg0, %c0_i32 : i32
    %1 = arith.extui %0 : i1 to i32
    %c0_i32_0 = arith.constant 0 : i32
    %2 = arith.cmpi ne, %1, %c0_i32_0 : i32
    scf.if %2 {
      %cst_14 = arith.constant 0.000000e+00 : f32
      %17 = vector.broadcast %cst_14 : f32 to vector<1x128xf32>
      %c0_15 = arith.constant 0 : index
      %c0_16 = arith.constant 0 : index
      %18 = vector.load %arg3[%c0_15, %c0_16] : memref<1x128xf32, #tpu.memory_space<vmem>>, vector<1x128xf32>
      tpu.vector_store %arg3[%c0_15, %c0_16], %17 {strides = array<i32>} : memref<1x128xf32, #tpu.memory_space<vmem>>, vector<1x128xf32>,
      %cst_17 = arith.constant 0.000000e+00 : f32
      %19 = vector.broadcast %cst_17 : f32 to vector<1x128xf32>
      %c0_18 = arith.constant 0 : index
      %c0_19 = arith.constant 0 : index
      %20 = vector.load %arg4[%c0_18, %c0_19] : memref<1x128xf32, #tpu.memory_space<vmem>>, vector<1x128xf32>
      tpu.vector_store %arg4[%c0_18, %c0_19], %19 {strides = array<i32>} : memref<1x128xf32, #tpu.memory_space<vmem>>, vector<1x128xf32>,
    } else {
    }
    %c0 = arith.constant 0 : index
    %c0_1 = arith.constant 0 : index
    %3 = vector.load %arg1[%c0, %c0_1] : memref<512x36xf32, #tpu.memory_space<vmem>>, vector<512x36xf32>
    %c0_2 = arith.constant 0 : index
    %c0_3 = arith.constant 0 : index
    %4 = vector.load %arg2[%c0_2, %c0_3] : memref<36x128xf32, #tpu.memory_space<vmem>>, vector<36x128xf32>
    %cst = arith.constant dense<0.000000e+00> : vector<512x128xf32>
    %5 = tpu.matmul %3, %4, %cst {dimension_numbers = #tpu.dot_dimension_numbers<[1], [0], [0], [1], [0, 0, 1, 1], [], []>} : vector<512x36xf32>, vector<36x128xf32>, vector<512x128xf32> -> vector<512x128xf32>
    %c0_4 = arith.constant 0 : index
    %c0_5 = arith.constant 0 : index
    %6 = vector.load %arg3[%c0_4, %c0_5] : memref<1x128xf32, #tpu.memory_space<vmem>>, vector<1x128xf32>
    %cst_6 = arith.constant dense<0.000000e+00> : vector<128xf32>
    %7 = vector.multi_reduction <add>, %5, %cst_6 [0] : vector<512x128xf32> to vector<128xf32>
    %8 = vector.shape_cast %7 : vector<128xf32> to vector<1x128xf32>
    %9 = arith.addf %6, %8 : vector<1x128xf32>
    %c0_7 = arith.constant 0 : index
    %c0_8 = arith.constant 0 : index
    %10 = vector.load %arg3[%c0_7, %c0_8] : memref<1x128xf32, #tpu.memory_space<vmem>>, vector<1x128xf32>
    tpu.vector_store %arg3[%c0_7, %c0_8], %9 {strides = array<i32>} : memref<1x128xf32, #tpu.memory_space<vmem>>, vector<1x128xf32>,
    %c0_9 = arith.constant 0 : index
    %c0_10 = arith.constant 0 : index
    %11 = vector.load %arg4[%c0_9, %c0_10] : memref<1x128xf32, #tpu.memory_space<vmem>>, vector<1x128xf32>
    %12 = arith.mulf %5, %5 : vector<512x128xf32>
    %cst_11 = arith.constant dense<0.000000e+00> : vector<128xf32>
    %13 = vector.multi_reduction <add>, %12, %cst_11 [0] : vector<512x128xf32> to vector<128xf32>
    %14 = vector.shape_cast %13 : vector<128xf32> to vector<1x128xf32>
    %15 = arith.addf %11, %14 : vector<1x128xf32>
    %c0_12 = arith.constant 0 : index
    %c0_13 = arith.constant 0 : index
    %16 = vector.load %arg4[%c0_12, %c0_13] : memref<1x128xf32, #tpu.memory_space<vmem>>, vector<1x128xf32>
    tpu.vector_store %arg4[%c0_12, %c0_13], %15 {strides = array<i32>} : memref<1x128xf32, #tpu.memory_space<vmem>>, vector<1x128xf32>,
    return
  }
  func.func @transform_0(%arg0: i32) -> (i32, i32) {
    %c0_i32 = arith.constant 0 : i32
    %c0_i32_0 = arith.constant 0 : i32
    return %arg0, %c0_i32 : i32, i32
  }
  func.func @transform_1(%arg0: i32) -> (i32, i32) {
    %c0_i32 = arith.constant 0 : i32
    %c0_i32_0 = arith.constant 0 : i32
    %c0_i32_1 = arith.constant 0 : i32
    return %c0_i32, %c0_i32_0 : i32, i32
  }
  func.func @transform_2(%arg0: i32) -> (i32, i32) {
    %c0_i32 = arith.constant 0 : i32
    %c0_i32_0 = arith.constant 0 : i32
    %c0_i32_1 = arith.constant 0 : i32
    return %c0_i32, %c0_i32_0 : i32, i32
  }
  func.func @transform_3(%arg0: i32) -> (i32, i32) {
    %c0_i32 = arith.constant 0 : i32
    %c0_i32_0 = arith.constant 0 : i32
    %c0_i32_1 = arith.constant 0 : i32
    return %c0_i32, %c0_i32_0 : i32, i32
  }
}

</mosaic_0001>

<llo_original>
// kernel: tpu_custom_call.1
$region0: #{tpu_custom_call.1}
  #allocation0 [shape = 'u32[]', space=smem, size = 0x4, offset = 0x4, fixed_abs, tag = 'smem constant byte address 0x4 - core index']
  #allocation1 [shape = 'u32[72,128]{1,0:T(1,128)}', space=vmem, size = 0x9000, scoped, tag = 'internal scratch']
  %s0 = inlined_call_operand.vmem [shape: f32[512,36], index: 0, kind: input, shape index: {}]
  %s1 = inlined_call_operand.vmem [shape: f32[36,128], index: 1, kind: input, shape index: {}]
  %s2 = inlined_call_operand.hbm [shape: f32[1,128], index: 2, kind: output, shape index: {0}]
  %s3 = inlined_call_operand.hbm [shape: f32[1,128], index: 3, kind: output, shape index: {1}]
  %4 = xla_tuple %s2, %s3
  %s5 = sld [smem:[#allocation0]]
  $region30: #{tpu_custom_call.1} parent=0
    _
  %s7 = ssub.s32 1, %s5
  %s8 = scalar_select 0, %s7, %s5
  $region1: #{tpu_custom_call.1} parent=0
    #allocation2 [shape = 'u8[512]{0}', space=vmem, size = 0x400, scoped, tag = 'output window, operand 0, single buffered']
    #allocation3 [shape = 's32[1]{0}', space=sflag, size = 0x4, scoped, tag = 'scoped memory for tpu_custom_call.1']
    #allocation4 [shape = 'u8[512]{0}', space=vmem, size = 0x400, scoped, tag = 'output window, operand 1, single buffered']
    #allocation5 [shape = 's32[1]{0}', space=sflag, size = 0x4, scoped, tag = 'scoped memory for tpu_custom_call.1']
    %9 = vsyncpa [#allocation3], 0
    %10 = vsyncpa [#allocation5], 0
    // Predicated region
    $region2: #{tpu_custom_call.1} parent=1 // pred_check
      _
    $region3: #{tpu_custom_call.1} parent=1 // pred_check_branch
      %12 = sbr.rel (0) target = $region5
    $region4: #{tpu_custom_call.1} parent=1 // pred_region
      _
    $region5: #{tpu_custom_call.1} parent=1 // pred_fallthru
      _
    // Predicated region
    $region6: #{tpu_custom_call.1} parent=1 // pred_check
      _
    $region7: #{tpu_custom_call.1} parent=1 // pred_check_branch
      %14 = sbr.rel (0) target = $region9
    $region8: #{tpu_custom_call.1} parent=1 // pred_region
      _
    $region9: #{tpu_custom_call.1} parent=1 // pred_fallthru
      _
    %p15 = scmp.eq.s32.totalorder 0, 0
    // Predicated region
    $region10: #{tpu_custom_call.1} parent=1 // pred_check
      %p16 = pneg %p15
    $region11: #{tpu_custom_call.1} parent=1 // pred_check_branch
      %18 = sbr.rel (%p16) target = $region13
    $region12: #{tpu_custom_call.1} parent=1 // pred_region
      %19 = vst [vmem:[#allocation2] sm:$0x1] 0.0
      %20 = vst [vmem:[#allocation4] sm:$0x1] 0.0
    $region13: #{tpu_custom_call.1} parent=1 // pred_fallthru
      _
    %v21 = vld [vmem:[%s0] sm:$0xff]
    %v22 = vld [vmem:[%s0 + $0x8] sm:$0xff]
    %v23 = vld [vmem:[%s0 + $0x10] sm:$0xff]
    %v24 = vld [vmem:[%s0 + $0x18] sm:$0xff]
    %v25 = vld [vmem:[%s0 + $0x20] sm:$0xff]
    %v26 = vld [vmem:[%s0 + $0x28] sm:$0xff]
    %v27 = vld [vmem:[%s0 + $0x30] sm:$0xff]
    %v28 = vld [vmem:[%s0 + $0x38] sm:$0xff]
    %v29 = vld [vmem:[%s0 + $0x40] sm:$0xff]
    %v30 = vld [vmem:[%s0 + $0x48] sm:$0xff]
    %v31 = vld [vmem:[%s0 + $0x50] sm:$0xff]
    %v32 = vld [vmem:[%s0 + $0x58] sm:$0xff]
    %v33 = vld [vmem:[%s0 + $0x60] sm:$0xff]
    %v34 = vld [vmem:[%s0 + $0x68] sm:$0xff]
    %v35 = vld [vmem:[%s0 + $0x70] sm:$0xff]
    %v36 = vld [vmem:[%s0 + $0x78] sm:$0xff]
    %v37 = vld [vmem:[%s0 + $0x80] sm:$0xff]
    %v38 = vld [vmem:[%s0 + $0x88] sm:$0xff]
    %v39 = vld [vmem:[%s0 + $0x90] sm:$0xff]
    %v40 = vld [vmem:[%s0 + $0x98] sm:$0xff]
    %v41 = vld [vmem:[%s0 + $0xa0] sm:$0xff]
    %v42 = vld [vmem:[%s0 + $0xa8] sm:$0xff]
    %v43 = vld [vmem:[%s0 + $0xb0] sm:$0xff]
    %v44 = vld [vmem:[%s0 + $0xb8] sm:$0xff]
    %v45 = vld [vmem:[%s0 + $0xc0] sm:$0xff]
    %v46 = vld [vmem:[%s0 + $0xc8] sm:$0xff]
    %v47 = vld [vmem:[%s0 + $0xd0] sm:$0xff]
    %v48 = vld [vmem:[%s0 + $0xd8] sm:$0xff]
    %v49 = vld [vmem:[%s0 + $0xe0] sm:$0xff]
    %v50 = vld [vmem:[%s0 + $0xe8] sm:$0xff]
    %v51 = vld [vmem:[%s0 + $0xf0] sm:$0xff]
    %v52 = vld [vmem:[%s0 + $0xf8] sm:$0xff]
    %v53 = vld [vmem:[%s0 + $0x100] sm:$0xff]
    %v54 = vld [vmem:[%s0 + $0x108] sm:$0xff]
    %v55 = vld [vmem:[%s0 + $0x110] sm:$0xff]
    %v56 = vld [vmem:[%s0 + $0x118] sm:$0xff]
    %v57 = vld [vmem:[%s0 + $0x120] sm:$0xff]
    %v58 = vld [vmem:[%s0 + $0x128] sm:$0xff]
    %v59 = vld [vmem:[%s0 + $0x130] sm:$0xff]
    %v60 = vld [vmem:[%s0 + $0x138] sm:$0xff]
    %v61 = vld [vmem:[%s0 + $0x140] sm:$0xff]
    %v62 = vld [vmem:[%s0 + $0x148] sm:$0xff]
    %v63 = vld [vmem:[%s0 + $0x150] sm:$0xff]
    %v64 = vld [vmem:[%s0 + $0x158] sm:$0xff]
    %v65 = vld [vmem:[%s0 + $0x160] sm:$0xff]
    %v66 = vld [vmem:[%s0 + $0x168] sm:$0xff]
    %v67 = vld [vmem:[%s0 + $0x170] sm:$0xff]
    %v68 = vld [vmem:[%s0 + $0x178] sm:$0xff]
    %v69 = vld [vmem:[%s0 + $0x180] sm:$0xff]
    %v70 = vld [vmem:[%s0 + $0x188] sm:$0xff]
    %v71 = vld [vmem:[%s0 + $0x190] sm:$0xff]
    %v72 = vld [vmem:[%s0 + $0x198] sm:$0xff]
    %v73 = vld [vmem:[%s0 + $0x1a0] sm:$0xff]
    %v74 = vld [vmem:[%s0 + $0x1a8] sm:$0xff]
    %v75 = vld [vmem:[%s0 + $0x1b0] sm:$0xff]
    %v76 = vld [vmem:[%s0 + $0x1b8] sm:$0xff]
    %v77 = vld [vmem:[%s0 + $0x1c0] sm:$0xff]
    %v78 = vld [vmem:[%s0 + $0x1c8] sm:$0xff]
    %v79 = vld [vmem:[%s0 + $0x1d0] sm:$0xff]
    %v80 = vld [vmem:[%s0 + $0x1d8] sm:$0xff]
    %v81 = vld [vmem:[%s0 + $0x1e0] sm:$0xff]
    %v82 = vld [vmem:[%s0 + $0x1e8] sm:$0xff]
    %v83 = vld [vmem:[%s0 + $0x1f0] sm:$0xff]
    %v84 = vld [vmem:[%s0 + $0x1f8] sm:$0xff]
    %v85 = vld [vmem:[%s1] sm:$0xff]
    %v86 = vld [vmem:[%s1 + $0x8] sm:$0xff]
    %v87 = vld [vmem:[%s1 + $0x10] sm:$0xff]
    %v88 = vld [vmem:[%s1 + $0x18] sm:$0xff]
    %v89 = vld [vmem:[%s1 + $0x20] sm:$0xf]
    %vm90 = vcmask 293888
    %v92 = vsel %vm90, %v21, 0
    %v95 = vsel %vm90, %v22, 0
    %v98 = vsel %vm90, %v23, 0
    %v101 = vsel %vm90, %v24, 0
    %v104 = vsel %vm90, %v25, 0
    %v107 = vsel %vm90, %v26, 0
    %v110 = vsel %vm90, %v27, 0
    %v113 = vsel %vm90, %v28, 0
    %v116 = vsel %vm90, %v29, 0
    %v119 = vsel %vm90, %v30, 0
    %v122 = vsel %vm90, %v31, 0
    %v125 = vsel %vm90, %v32, 0
    %v128 = vsel %vm90, %v33, 0
    %v131 = vsel %vm90, %v34, 0
    %v134 = vsel %vm90, %v35, 0
    %v137 = vsel %vm90, %v36, 0
    %v140 = vsel %vm90, %v37, 0
    %v143 = vsel %vm90, %v38, 0
    %v146 = vsel %vm90, %v39, 0
    %v149 = vsel %vm90, %v40, 0
    %v152 = vsel %vm90, %v41, 0
    %v155 = vsel %vm90, %v42, 0
    %v158 = vsel %vm90, %v43, 0
    %v161 = vsel %vm90, %v44, 0
    %v164 = vsel %vm90, %v45, 0
    %v167 = vsel %vm90, %v46, 0
    %v170 = vsel %vm90, %v47, 0
    %v173 = vsel %vm90, %v48, 0
    %v176 = vsel %vm90, %v49, 0
    %v179 = vsel %vm90, %v50, 0
    %v182 = vsel %vm90, %v51, 0
    %v185 = vsel %vm90, %v52, 0
    %v188 = vsel %vm90, %v53, 0
    %v191 = vsel %vm90, %v54, 0
    %v194 = vsel %vm90, %v55, 0
    %v197 = vsel %vm90, %v56, 0
    %v200 = vsel %vm90, %v57, 0
    %v203 = vsel %vm90, %v58, 0
    %v206 = vsel %vm90, %v59, 0
    %v209 = vsel %vm90, %v60, 0
    %v212 = vsel %vm90, %v61, 0
    %v215 = vsel %vm90, %v62, 0
    %v218 = vsel %vm90, %v63, 0
    %v221 = vsel %vm90, %v64, 0
    %v224 = vsel %vm90, %v65, 0
    %v227 = vsel %vm90, %v66, 0
    %v230 = vsel %vm90, %v67, 0
    %v233 = vsel %vm90, %v68, 0
    %v236 = vsel %vm90, %v69, 0
    %v239 = vsel %vm90, %v70, 0
    %v242 = vsel %vm90, %v71, 0
    %v245 = vsel %vm90, %v72, 0
    %v248 = vsel %vm90, %v73, 0
    %v251 = vsel %vm90, %v74, 0
    %v254 = vsel %vm90, %v75, 0
    %v257 = vsel %vm90, %v76, 0
    %v260 = vsel %vm90, %v77, 0
    %v263 = vsel %vm90, %v78, 0
    %v266 = vsel %vm90, %v79, 0
    %v269 = vsel %vm90, %v80, 0
    %v272 = vsel %vm90, %v81, 0
    %v275 = vsel %vm90, %v82, 0
    %v278 = vsel %vm90, %v83, 0
    %v281 = vsel %vm90, %v84, 0
    %vm283 = vcmask 1043456
    %v285 = vsel %vm283, %v89, 0
    %287 = vmatpush.msra.mxu0 0.0
    %288 = vmatpush.msra.mxu0 0.0
    %289 = vmatpush.msra.mxu0 0.0
    %290 = vmatpush.msra.mxu0 0.0
    %291 = vmatpush.msra.mxu0 0.0
    %292 = vmatpush.msra.mxu0 0.0
    %293 = vmatpush.msra.mxu0 0.0
    %294 = vmatpush.msra.mxu0 0.0
    %295 = vmatpush.msra.mxu0 0.0
    %296 = vmatpush.msra.mxu0 0.0
    %297 = vmatpush.msra.mxu0 0.0
    %298 = vmatpush.msra.mxu0 %v285
    %299 = vmatpush.msra.mxu0 %v88
    %300 = vmatpush.msra.mxu0 %v87
    %301 = vmatpush.msra.mxu0 %v86
    %302 = vmatpush.msra.mxu0 %v85
    %303 = vmatmul.f32.gmra.mxu0 %v92
    %v304 = vpop.f32.mrf.mxu0
    %v305 = vadd.f32 0.0, %v304
    %306 = vmatmul.f32.gmra.mxu0 %v95
    %v307 = vpop.f32.mrf.mxu0
    %v308 = vadd.f32 0.0, %v307
    %309 = vmatmul.f32.gmra.mxu0 %v98
    %v310 = vpop.f32.mrf.mxu0
    %v311 = vadd.f32 0.0, %v310
    %312 = vmatmul.f32.gmra.mxu0 %v101
    %v313 = vpop.f32.mrf.mxu0
    %v314 = vadd.f32 0.0, %v313
    %315 = vmatmul.f32.gmra.mxu0 %v104
    %v316 = vpop.f32.mrf.mxu0
    %v317 = vadd.f32 0.0, %v316
    %318 = vmatmul.f32.gmra.mxu0 %v107
    %v319 = vpop.f32.mrf.mxu0
    %v320 = vadd.f32 0.0, %v319
    %321 = vmatmul.f32.gmra.mxu0 %v110
    %v322 = vpop.f32.mrf.mxu0
    %v323 = vadd.f32 0.0, %v322
    %324 = vmatmul.f32.gmra.mxu0 %v113
    %v325 = vpop.f32.mrf.mxu0
    %v326 = vadd.f32 0.0, %v325
    %327 = vmatmul.f32.gmra.mxu0 %v116
    %v328 = vpop.f32.mrf.mxu0
    %v329 = vadd.f32 0.0, %v328
    %330 = vmatmul.f32.gmra.mxu0 %v119
    %v331 = vpop.f32.mrf.mxu0
    %v332 = vadd.f32 0.0, %v331
    %333 = vmatmul.f32.gmra.mxu0 %v122
    %v334 = vpop.f32.mrf.mxu0
    %v335 = vadd.f32 0.0, %v334
    %336 = vmatmul.f32.gmra.mxu0 %v125
    %v337 = vpop.f32.mrf.mxu0
    %v338 = vadd.f32 0.0, %v337
    %339 = vmatmul.f32.gmra.mxu0 %v128
    %v340 = vpop.f32.mrf.mxu0
    %v341 = vadd.f32 0.0, %v340
    %342 = vmatmul.f32.gmra.mxu0 %v131
    %v343 = vpop.f32.mrf.mxu0
    %v344 = vadd.f32 0.0, %v343
    %345 = vmatmul.f32.gmra.mxu0 %v134
    %v346 = vpop.f32.mrf.mxu0
    %v347 = vadd.f32 0.0, %v346
    %348 = vmatmul.f32.gmra.mxu0 %v137
    %v349 = vpop.f32.mrf.mxu0
    %v350 = vadd.f32 0.0, %v349
    %351 = vmatmul.f32.gmra.mxu0 %v140
    %v352 = vpop.f32.mrf.mxu0
    %v353 = vadd.f32 0.0, %v352
    %354 = vmatmul.f32.gmra.mxu0 %v143
    %v355 = vpop.f32.mrf.mxu0
    %v356 = vadd.f32 0.0, %v355
    %357 = vmatmul.f32.gmra.mxu0 %v146
    %v358 = vpop.f32.mrf.mxu0
    %v359 = vadd.f32 0.0, %v358
    %360 = vmatmul.f32.gmra.mxu0 %v149
    %v361 = vpop.f32.mrf.mxu0
    %v362 = vadd.f32 0.0, %v361
    %363 = vmatmul.f32.gmra.mxu0 %v152
    %v364 = vpop.f32.mrf.mxu0
    %v365 = vadd.f32 0.0, %v364
    %366 = vmatmul.f32.gmra.mxu0 %v155
    %v367 = vpop.f32.mrf.mxu0
    %v368 = vadd.f32 0.0, %v367
    %369 = vmatmul.f32.gmra.mxu0 %v158
    %v370 = vpop.f32.mrf.mxu0
    %v371 = vadd.f32 0.0, %v370
    %372 = vmatmul.f32.gmra.mxu0 %v161
    %v373 = vpop.f32.mrf.mxu0
    %v374 = vadd.f32 0.0, %v373
    %375 = vmatmul.f32.gmra.mxu0 %v164
    %v376 = vpop.f32.mrf.mxu0
    %v377 = vadd.f32 0.0, %v376
    %378 = vmatmul.f32.gmra.mxu0 %v167
    %v379 = vpop.f32.mrf.mxu0
    %v380 = vadd.f32 0.0, %v379
    %381 = vmatmul.f32.gmra.mxu0 %v170
    %v382 = vpop.f32.mrf.mxu0
    %v383 = vadd.f32 0.0, %v382
    %384 = vmatmul.f32.gmra.mxu0 %v173
    %v385 = vpop.f32.mrf.mxu0
    %v386 = vadd.f32 0.0, %v385
    %387 = vmatmul.f32.gmra.mxu0 %v176
    %v388 = vpop.f32.mrf.mxu0
    %v389 = vadd.f32 0.0, %v388
    %390 = vmatmul.f32.gmra.mxu0 %v179
    %v391 = vpop.f32.mrf.mxu0
    %v392 = vadd.f32 0.0, %v391
    %393 = vmatmul.f32.gmra.mxu0 %v182
    %v394 = vpop.f32.mrf.mxu0
    %v395 = vadd.f32 0.0, %v394
    %396 = vmatmul.f32.gmra.mxu0 %v185
    %v397 = vpop.f32.mrf.mxu0
    %v398 = vadd.f32 0.0, %v397
    %399 = vmatmul.f32.gmra.mxu0 %v188
    %v400 = vpop.f32.mrf.mxu0
    %v401 = vadd.f32 0.0, %v400
    %402 = vmatmul.f32.gmra.mxu0 %v191
    %v403 = vpop.f32.mrf.mxu0
    %v404 = vadd.f32 0.0, %v403
    %405 = vmatmul.f32.gmra.mxu0 %v194
    %v406 = vpop.f32.mrf.mxu0
    %v407 = vadd.f32 0.0, %v406
    %408 = vmatmul.f32.gmra.mxu0 %v197
    %v409 = vpop.f32.mrf.mxu0
    %v410 = vadd.f32 0.0, %v409
    %411 = vmatmul.f32.gmra.mxu0 %v200
    %v412 = vpop.f32.mrf.mxu0
    %v413 = vadd.f32 0.0, %v412
    %414 = vmatmul.f32.gmra.mxu0 %v203
    %v415 = vpop.f32.mrf.mxu0
    %v416 = vadd.f32 0.0, %v415
    %417 = vmatmul.f32.gmra.mxu0 %v206
    %v418 = vpop.f32.mrf.mxu0
    %v419 = vadd.f32 0.0, %v418
    %420 = vmatmul.f32.gmra.mxu0 %v209
    %v421 = vpop.f32.mrf.mxu0
    %v422 = vadd.f32 0.0, %v421
    %423 = vmatmul.f32.gmra.mxu0 %v212
    %v424 = vpop.f32.mrf.mxu0
    %v425 = vadd.f32 0.0, %v424
    %426 = vmatmul.f32.gmra.mxu0 %v215
    %v427 = vpop.f32.mrf.mxu0
    %v428 = vadd.f32 0.0, %v427
    %429 = vmatmul.f32.gmra.mxu0 %v218
    %v430 = vpop.f32.mrf.mxu0
    %v431 = vadd.f32 0.0, %v430
    %432 = vmatmul.f32.gmra.mxu0 %v221
    %v433 = vpop.f32.mrf.mxu0
    %v434 = vadd.f32 0.0, %v433
    %435 = vmatmul.f32.gmra.mxu0 %v224
    %v436 = vpop.f32.mrf.mxu0
    %v437 = vadd.f32 0.0, %v436
    %438 = vmatmul.f32.gmra.mxu0 %v227
    %v439 = vpop.f32.mrf.mxu0
    %v440 = vadd.f32 0.0, %v439
    %441 = vmatmul.f32.gmra.mxu0 %v230
    %v442 = vpop.f32.mrf.mxu0
    %v443 = vadd.f32 0.0, %v442
    %444 = vmatmul.f32.gmra.mxu0 %v233
    %v445 = vpop.f32.mrf.mxu0
    %v446 = vadd.f32 0.0, %v445
    %447 = vmatmul.f32.gmra.mxu0 %v236
    %v448 = vpop.f32.mrf.mxu0
    %v449 = vadd.f32 0.0, %v448
    %450 = vmatmul.f32.gmra.mxu0 %v239
    %v451 = vpop.f32.mrf.mxu0
    %v452 = vadd.f32 0.0, %v451
    %453 = vmatmul.f32.gmra.mxu0 %v242
    %v454 = vpop.f32.mrf.mxu0
    %v455 = vadd.f32 0.0, %v454
    %456 = vmatmul.f32.gmra.mxu0 %v245
    %v457 = vpop.f32.mrf.mxu0
    %v458 = vadd.f32 0.0, %v457
    %459 = vmatmul.f32.gmra.mxu0 %v248
    %v460 = vpop.f32.mrf.mxu0
    %v461 = vadd.f32 0.0, %v460
    %462 = vmatmul.f32.gmra.mxu0 %v251
    %v463 = vpop.f32.mrf.mxu0
    %v464 = vadd.f32 0.0, %v463
    %465 = vmatmul.f32.gmra.mxu0 %v254
    %v466 = vpop.f32.mrf.mxu0
    %v467 = vadd.f32 0.0, %v466
    %468 = vmatmul.f32.gmra.mxu0 %v257
    %v469 = vpop.f32.mrf.mxu0
    %v470 = vadd.f32 0.0, %v469
    %471 = vmatmul.f32.gmra.mxu0 %v260
    %v472 = vpop.f32.mrf.mxu0
    %v473 = vadd.f32 0.0, %v472
    %474 = vmatmul.f32.gmra.mxu0 %v263
    %v475 = vpop.f32.mrf.mxu0
    %v476 = vadd.f32 0.0, %v475
    %477 = vmatmul.f32.gmra.mxu0 %v266
    %v478 = vpop.f32.mrf.mxu0
    %v479 = vadd.f32 0.0, %v478
    %480 = vmatmul.f32.gmra.mxu0 %v269
    %v481 = vpop.f32.mrf.mxu0
    %v482 = vadd.f32 0.0, %v481
    %483 = vmatmul.f32.gmra.mxu0 %v272
    %v484 = vpop.f32.mrf.mxu0
    %v485 = vadd.f32 0.0, %v484
    %486 = vmatmul.f32.gmra.mxu0 %v275
    %v487 = vpop.f32.mrf.mxu0
    %v488 = vadd.f32 0.0, %v487
    %489 = vmatmul.f32.gmra.mxu0 %v278
    %v490 = vpop.f32.mrf.mxu0
    %v491 = vadd.f32 0.0, %v490
    %492 = vmatmul.f32.gmra.mxu0 %v281
    %v493 = vpop.f32.mrf.mxu0
    %v494 = vadd.f32 0.0, %v493
    %495 = vdwg.mxu0
    %v496 = vld [vmem:[#allocation2] sm:$0x1]
    %v497 = vadd.f32 %v305, %v308
    %v498 = vadd.f32 %v497, %v311
    %v499 = vadd.f32 %v498, %v314
    %v500 = vadd.f32 %v499, %v317
    %v501 = vadd.f32 %v500, %v320
    %v502 = vadd.f32 %v501, %v323
    %v503 = vadd.f32 %v502, %v326
    %v504 = vadd.f32 %v503, %v329
    %v505 = vadd.f32 %v504, %v332
    %v506 = vadd.f32 %v505, %v335
    %v507 = vadd.f32 %v506, %v338
    %v508 = vadd.f32 %v507, %v341
    %v509 = vadd.f32 %v508, %v344
    %v510 = vadd.f32 %v509, %v347
    %v511 = vadd.f32 %v510, %v350
    %v512 = vadd.f32 %v511, %v353
    %v513 = vadd.f32 %v512, %v356
    %v514 = vadd.f32 %v513, %v359
    %v515 = vadd.f32 %v514, %v362
    %v516 = vadd.f32 %v515, %v365
    %v517 = vadd.f32 %v516, %v368
    %v518 = vadd.f32 %v517, %v371
    %v519 = vadd.f32 %v518, %v374
    %v520 = vadd.f32 %v519, %v377
    %v521 = vadd.f32 %v520, %v380
    %v522 = vadd.f32 %v521, %v383
    %v523 = vadd.f32 %v522, %v386
    %v524 = vadd.f32 %v523, %v389
    %v525 = vadd.f32 %v524, %v392
    %v526 = vadd.f32 %v525, %v395
    %v527 = vadd.f32 %v526, %v398
    %v528 = vadd.f32 %v527, %v401
    %v529 = vadd.f32 %v528, %v404
    %v530 = vadd.f32 %v529, %v407
    %v531 = vadd.f32 %v530, %v410
    %v532 = vadd.f32 %v531, %v413
    %v533 = vadd.f32 %v532, %v416
    %v534 = vadd.f32 %v533, %v419
    %v535 = vadd.f32 %v534, %v422
    %v536 = vadd.f32 %v535, %v425
    %v537 = vadd.f32 %v536, %v428
    %v538 = vadd.f32 %v537, %v431
    %v539 = vadd.f32 %v538, %v434
    %v540 = vadd.f32 %v539, %v437
    %v541 = vadd.f32 %v540, %v440
    %v542 = vadd.f32 %v541, %v443
    %v543 = vadd.f32 %v542, %v446
    %v544 = vadd.f32 %v543, %v449
    %v545 = vadd.f32 %v544, %v452
    %v546 = vadd.f32 %v545, %v455
    %v547 = vadd.f32 %v546, %v458
    %v548 = vadd.f32 %v547, %v461
    %v549 = vadd.f32 %v548, %v464
    %v550 = vadd.f32 %v549, %v467
    %v551 = vadd.f32 %v550, %v470
    %v552 = vadd.f32 %v551, %v473
    %v553 = vadd.f32 %v552, %v476
    %v554 = vadd.f32 %v553, %v479
    %v555 = vadd.f32 %v554, %v482
    %v556 = vadd.f32 %v555, %v485
    %v557 = vadd.f32 %v556, %v488
    %v558 = vadd.f32 %v557, %v491
    %v559 = vadd.f32 %v558, %v494
    %v560 = vrot.slane %v559, 4
    %v561 = vadd.f32 %v559, %v560
    %v562 = vrot.slane %v561, 2
    %v563 = vadd.f32 %v561, %v562
    %v564 = vrot.slane %v563, 1
    %v565 = vadd.f32 %v563, %v564
    %v566 = vadd.f32 %v496, %v565
    %567 = vst [vmem:[#allocation2] sm:$0x1] %v566
    %v568 = vld [vmem:[#allocation4] sm:$0x1]
    %v569 = vmul.f32 %v305, %v305
    %v570 = vmul.f32 %v308, %v308
    %v571 = vmul.f32 %v311, %v311
    %v572 = vmul.f32 %v314, %v314
    %v573 = vmul.f32 %v317, %v317
    %v574 = vmul.f32 %v320, %v320
    %v575 = vmul.f32 %v323, %v323
    %v576 = vmul.f32 %v326, %v326
    %v577 = vmul.f32 %v329, %v329
    %v578 = vmul.f32 %v332, %v332
    %v579 = vmul.f32 %v335, %v335
    %v580 = vmul.f32 %v338, %v338
    %v581 = vmul.f32 %v341, %v341
    %v582 = vmul.f32 %v344, %v344
    %v583 = vmul.f32 %v347, %v347
    %v584 = vmul.f32 %v350, %v350
    %v585 = vmul.f32 %v353, %v353
    %v586 = vmul.f32 %v356, %v356
    %v587 = vmul.f32 %v359, %v359
    %v588 = vmul.f32 %v362, %v362
    %v589 = vmul.f32 %v365, %v365
    %v590 = vmul.f32 %v368, %v368
    %v591 = vmul.f32 %v371, %v371
    %v592 = vmul.f32 %v374, %v374
    %v593 = vmul.f32 %v377, %v377
    %v594 = vmul.f32 %v380, %v380
    %v595 = vmul.f32 %v383, %v383
    %v596 = vmul.f32 %v386, %v386
    %v597 = vmul.f32 %v389, %v389
    %v598 = vmul.f32 %v392, %v392
    %v599 = vmul.f32 %v395, %v395
    %v600 = vmul.f32 %v398, %v398
    %v601 = vmul.f32 %v401, %v401
    %v602 = vmul.f32 %v404, %v404
    %v603 = vmul.f32 %v407, %v407
    %v604 = vmul.f32 %v410, %v410
    %v605 = vmul.f32 %v413, %v413
    %v606 = vmul.f32 %v416, %v416
    %v607 = vmul.f32 %v419, %v419
    %v608 = vmul.f32 %v422, %v422
    %v609 = vmul.f32 %v425, %v425
    %v610 = vmul.f32 %v428, %v428
    %v611 = vmul.f32 %v431, %v431
    %v612 = vmul.f32 %v434, %v434
    %v613 = vmul.f32 %v437, %v437
    %v614 = vmul.f32 %v440, %v440
    %v615 = vmul.f32 %v443, %v443
    %v616 = vmul.f32 %v446, %v446
    %v617 = vmul.f32 %v449, %v449
    %v618 = vmul.f32 %v452, %v452
    %v619 = vmul.f32 %v455, %v455
    %v620 = vmul.f32 %v458, %v458
    %v621 = vmul.f32 %v461, %v461
    %v622 = vmul.f32 %v464, %v464
    %v623 = vmul.f32 %v467, %v467
    %v624 = vmul.f32 %v470, %v470
    %v625 = vmul.f32 %v473, %v473
    %v626 = vmul.f32 %v476, %v476
    %v627 = vmul.f32 %v479, %v479
    %v628 = vmul.f32 %v482, %v482
    %v629 = vmul.f32 %v485, %v485
    %v630 = vmul.f32 %v488, %v488
    %v631 = vmul.f32 %v491, %v491
    %v632 = vmul.f32 %v494, %v494
    %v633 = vadd.f32 %v569, %v570
    %v634 = vadd.f32 %v633, %v571
    %v635 = vadd.f32 %v634, %v572
    %v636 = vadd.f32 %v635, %v573
    %v637 = vadd.f32 %v636, %v574
    %v638 = vadd.f32 %v637, %v575
    %v639 = vadd.f32 %v638, %v576
    %v640 = vadd.f32 %v639, %v577
    %v641 = vadd.f32 %v640, %v578
    %v642 = vadd.f32 %v641, %v579
    %v643 = vadd.f32 %v642, %v580
    %v644 = vadd.f32 %v643, %v581
    %v645 = vadd.f32 %v644, %v582
    %v646 = vadd.f32 %v645, %v583
    %v647 = vadd.f32 %v646, %v584
    %v648 = vadd.f32 %v647, %v585
    %v649 = vadd.f32 %v648, %v586
    %v650 = vadd.f32 %v649, %v587
    %v651 = vadd.f32 %v650, %v588
    %v652 = vadd.f32 %v651, %v589
    %v653 = vadd.f32 %v652, %v590
    %v654 = vadd.f32 %v653, %v591
    %v655 = vadd.f32 %v654, %v592
    %v656 = vadd.f32 %v655, %v593
    %v657 = vadd.f32 %v656, %v594
    %v658 = vadd.f32 %v657, %v595
    %v659 = vadd.f32 %v658, %v596
    %v660 = vadd.f32 %v659, %v597
    %v661 = vadd.f32 %v660, %v598
    %v662 = vadd.f32 %v661, %v599
    %v663 = vadd.f32 %v662, %v600
    %v664 = vadd.f32 %v663, %v601
    %v665 = vadd.f32 %v664, %v602
    %v666 = vadd.f32 %v665, %v603
    %v667 = vadd.f32 %v666, %v604
    %v668 = vadd.f32 %v667, %v605
    %v669 = vadd.f32 %v668, %v606
    %v670 = vadd.f32 %v669, %v607
    %v671 = vadd.f32 %v670, %v608
    %v672 = vadd.f32 %v671, %v609
    %v673 = vadd.f32 %v672, %v610
    %v674 = vadd.f32 %v673, %v611
    %v675 = vadd.f32 %v674, %v612
    %v676 = vadd.f32 %v675, %v613
    %v677 = vadd.f32 %v676, %v614
    %v678 = vadd.f32 %v677, %v615
    %v679 = vadd.f32 %v678, %v616
    %v680 = vadd.f32 %v679, %v617
    %v681 = vadd.f32 %v680, %v618
    %v682 = vadd.f32 %v681, %v619
    %v683 = vadd.f32 %v682, %v620
    %v684 = vadd.f32 %v683, %v621
    %v685 = vadd.f32 %v684, %v622
    %v686 = vadd.f32 %v685, %v623
    %v687 = vadd.f32 %v686, %v624
    %v688 = vadd.f32 %v687, %v625
    %v689 = vadd.f32 %v688, %v626
    %v690 = vadd.f32 %v689, %v627
    %v691 = vadd.f32 %v690, %v628
    %v692 = vadd.f32 %v691, %v629
    %v693 = vadd.f32 %v692, %v630
    %v694 = vadd.f32 %v693, %v631
    %v695 = vadd.f32 %v694, %v632
    %v696 = vrot.slane %v695, 4
    %v697 = vadd.f32 %v695, %v696
    %v698 = vrot.slane %v697, 2
    %v699 = vadd.f32 %v697, %v698
    %v700 = vrot.slane %v699, 1
    %v701 = vadd.f32 %v699, %v700
    %v702 = vadd.f32 %v568, %v701
    %703 = vst [vmem:[#allocation4] sm:$0x1] %v702
    // Predicated region
    $region14: #{tpu_custom_call.1} parent=1 // pred_check
      _
    $region15: #{tpu_custom_call.1} parent=1 // pred_check_branch
      %705 = sbr.rel (0) target = $region17
    $region16: #{tpu_custom_call.1} parent=1 // pred_region
      %707 = vsyncadd [#allocation3], 0
      %s709 = sshll.u32 [#allocation2], 4
      %s710 = int_to_ptr.vmem [resolvable:$true] %s709
      %s711 = sshll.u32 %s2, 4
      %s712 = int_to_ptr.hbm [resolvable:$true] %s711
      %714 = dma.vmem_to_hbm [thread:$0]  %s710, 16, %s712, [#allocation3]
    $region17: #{tpu_custom_call.1} parent=1 // pred_fallthru
      _
    // Predicated region
    $region18: #{tpu_custom_call.1} parent=1 // pred_check
      _
    $region19: #{tpu_custom_call.1} parent=1 // pred_check_branch
      %716 = sbr.rel (0) target = $region21
    $region20: #{tpu_custom_call.1} parent=1 // pred_region
      %718 = vsyncadd [#allocation5], 0
      %s720 = sshll.u32 [#allocation4], 4
      %s721 = int_to_ptr.vmem [resolvable:$true] %s720
      %s722 = sshll.u32 %s3, 4
      %s723 = int_to_ptr.hbm [resolvable:$true] %s722
      %725 = dma.vmem_to_hbm [thread:$0]  %s721, 16, %s723, [#allocation5]
    $region21: #{tpu_custom_call.1} parent=1 // pred_fallthru
      _
    // Predicated region
    $region22: #{tpu_custom_call.1} parent=1 // pred_check
      _
    $region23: #{tpu_custom_call.1} parent=1 // pred_check_branch
      %727 = sbr.rel (0) target = $region25
    $region24: #{tpu_custom_call.1} parent=1 // pred_region
      %729 = dma.done [#allocation3], 16
    $region25: #{tpu_custom_call.1} parent=1 // pred_fallthru
      _
    // Predicated region
    $region26: #{tpu_custom_call.1} parent=1 // pred_check
      _
    $region27: #{tpu_custom_call.1} parent=1 // pred_check_branch
      %731 = sbr.rel (0) target = $region29
    $region28: #{tpu_custom_call.1} parent=1 // pred_region
      %733 = dma.done [#allocation5], 16
    $region29: #{tpu_custom_call.1} parent=1 // pred_fallthru
      _
    %734 = vsyncpa [#allocation3], 1
    %735 = vsyncpa [#allocation5], 1

</llo_original>
